<compile_context>
chip_gen: v6e
topology: v6e:2x2x1
jax: 0.10.0
libtpu: 0.0.40
codegen_flags: <defaults>
</compile_context>

<pallas_src>
import jax
import jax.numpy as jnp
from jax.experimental import pallas as pl
from jax.experimental.pallas import tpu as pltpu


def _recognition_kernel(ctx_ref, resp_ref, w_ctx_ref, w_resp_ref, b_ref,
                        mu_ref, logvar_ref):
    # Fused: two MXU matmuls (replacing the concat'd single matmul), bias add,
    # and the mu/logvar split, all in one pallas_call.
    h = jnp.dot(ctx_ref[...], w_ctx_ref[...], preferred_element_type=jnp.float32)
    h = h + jnp.dot(resp_ref[...], w_resp_ref[...],
                    preferred_element_type=jnp.float32)
    h = h + b_ref[...]                      # (block_b, 2Z), broadcast over batch
    z = mu_ref.shape[-1]
    mu_ref[...] = h[:, :z].astype(mu_ref.dtype)
    logvar_ref[...] = h[:, z:].astype(logvar_ref.dtype)


# Footprint guard for the gridless path (v7x scoped VMEM default is 32 MiB of
# its 64 MiB physical VMEM; stay well under it).
_GRIDLESS_MAX_BYTES = 8 * 1024 * 1024


def _auto_block_b(B):
    # Per-grid-step overhead is ~0.35 us; mem-bound tiling only reaches the HBM
    # roofline at >= ~512-row tiles, so target 512-2048 rows per tile.
    if B >= 4096:
        return 2048
    if B >= 2048:
        return 1024
    return 512


def no_emo_recognition(context_embedding, response_embedding, weight, bias,
                       z_dim, *, block_b=None):
    """Pallas equivalent of NoEmoRecognitionModule.forward.

    context_embedding : (B, E) f32
    response_embedding: (B, E) f32
    weight            : (2E, 2Z) f32   (transposed torch nn.Linear weight)
    bias              : (2Z,)    f32
    block_b           : optional batch tile; None -> auto (512-2048).
    returns (mu, logvar), each (B, Z) f32
    """
    B, E = context_embedding.shape
    two_z = 2 * z_dim
    assert response_embedding.shape == (B, E)
    assert weight.shape == (2 * E, two_z)
    assert bias.shape == (two_z,)

    # Pre-split the linear weight once (tiny arrays, done at trace time):
    #   cat([ctx, resp]) @ W  ==  ctx @ W[:E] + resp @ W[E:]
    w_ctx = weight[:E]          # (E, 2Z)
    w_resp = weight[E:]         # (E, 2Z)
    b2 = bias.reshape(1, two_z)  # 2-D for TPU layout, broadcast over batch

    out_dtype = context_embedding.dtype
    out_shapes = (jax.ShapeDtypeStruct((B, z_dim), out_dtype),
                  jax.ShapeDtypeStruct((B, z_dim), out_dtype))

    if block_b is None:
        block_b = _auto_block_b(B)
    block_b = max(8, min(block_b, ((B + 7) // 8) * 8))

    gridless_bytes = 4 * (2 * B * E + 2 * E * two_z + two_z + B * two_z)
    use_grid = (B > block_b) or (gridless_bytes > _GRIDLESS_MAX_BYTES)

    if not use_grid:
        # Tiny problem: single shot, everything in VMEM, no pipeline machinery.
        mu, logvar = pl.pallas_call(
            _recognition_kernel,
            out_shape=out_shapes,
            in_specs=[pl.BlockSpec(memory_space=pltpu.MemorySpace.VMEM)] * 5,
            out_specs=(pl.BlockSpec(memory_space=pltpu.MemorySpace.VMEM),
                       pl.BlockSpec(memory_space=pltpu.MemorySpace.VMEM)),
        )(context_embedding, response_embedding, w_ctx, w_resp, b2)
    else:
        # Batch-tiled path: cdiv grid (tail block padded/masked by Pallas),
        # batch axis marked "parallel" (megacore / v7x 2-TC sharding).
        grid = (pl.cdiv(B, block_b),)
        mu, logvar = pl.pallas_call(
            _recognition_kernel,
            out_shape=out_shapes,
            grid=grid,
            in_specs=[
                pl.BlockSpec((block_b, E), lambda i: (i, 0)),
                pl.BlockSpec((block_b, E), lambda i: (i, 0)),
                pl.BlockSpec((E, two_z), lambda i: (0, 0)),
                pl.BlockSpec((E, two_z), lambda i: (0, 0)),
                pl.BlockSpec((1, two_z), lambda i: (0, 0)),
            ],
            out_specs=(
                pl.BlockSpec((block_b, z_dim), lambda i: (i, 0)),
                pl.BlockSpec((block_b, z_dim), lambda i: (i, 0)),
            ),
            compiler_params=pltpu.CompilerParams(
                dimension_semantics=("parallel",)),
        )(context_embedding, response_embedding, w_ctx, w_resp, b2)

    return mu, logvar


def _reference(context_embedding, response_embedding, weight, bias, z_dim):
    x = jnp.concatenate([context_embedding, response_embedding], axis=1)
    h = x @ weight + bias
    return h[:, :z_dim], h[:, z_dim:]


if __name__ == "__main__":
    # Small shapes consistent with the module: batch=8, embed_dim=32, z_dim=16
    batch, embed_dim, z_dim = 8, 32, 16

    key = jax.random.PRNGKey(0)
    k_c, k_r, k_w, k_b, k_c2, k_r2 = jax.random.split(key, 6)

    context = jax.random.normal(k_c, (batch, embed_dim), dtype=jnp.float32)
    response = jax.random.normal(k_r, (batch, embed_dim), dtype=jnp.float32)

    # Deterministic init mimicking nn.Linear(embed_dim*2, z_dim*2):
    # uniform(-1/sqrt(fan_in), 1/sqrt(fan_in)), stored transposed as (2E, 2Z).
    fan_in = 2 * embed_dim
    bound = 1.0 / jnp.sqrt(jnp.float32(fan_in))
    weight = jax.random.uniform(
        k_w, (2 * embed_dim, 2 * z_dim), dtype=jnp.float32,
        minval=-bound, maxval=bound)
    bias = jax.random.uniform(
        k_b, (2 * z_dim,), dtype=jnp.float32, minval=-bound, maxval=bound)

    # --- gridless path (the actual module-sized case) ---
    mu, logvar = no_emo_recognition(context, response, weight, bias, z_dim)
    jax.block_until_ready((mu, logvar))

    mu_ref, logvar_ref = _reference(context, response, weight, bias, z_dim)
    assert mu.shape == (batch, z_dim) and logvar.shape == (batch, z_dim)
    assert jnp.allclose(mu, mu_ref, atol=1e-5), "mu mismatch (gridless)"
    assert jnp.allclose(logvar, logvar_ref, atol=1e-5), "logvar mismatch (gridless)"

    # --- batch-tiled path (pipelined / megacore path, non-divisible tail) ---
    big_b = 1000  # with block_b=512 -> grid=2 with a partial 488-row tail block
    context2 = jax.random.normal(k_c2, (big_b, embed_dim), dtype=jnp.float32)
    response2 = jax.random.normal(k_r2, (big_b, embed_dim), dtype=jnp.float32)
    mu2, logvar2 = no_emo_recognition(
        context2, response2, weight, bias, z_dim, block_b=512)
    jax.block_until_ready((mu2, logvar2))
    mu2_ref, logvar2_ref = _reference(context2, response2, weight, bias, z_dim)
    assert jnp.allclose(mu2, mu2_ref, atol=1e-5), "mu mismatch (tiled)"
    assert jnp.allclose(logvar2, logvar2_ref, atol=1e-5), "logvar mismatch (tiled)"

    print("KERNEL_OK")
</pallas_src>

<mosaic_0001>
module attributes {stable_mosaic.version = 11 : i64} {
  func.func @_recognition_kernel(%arg0: memref<8x32xf32, #tpu.memory_space<vmem>>, %arg1: memref<8x32xf32, #tpu.memory_space<vmem>>, %arg2: memref<32x32xf32, #tpu.memory_space<vmem>>, %arg3: memref<32x32xf32, #tpu.memory_space<vmem>>, %arg4: memref<1x32xf32, #tpu.memory_space<vmem>>, %arg5: memref<8x16xf32, #tpu.memory_space<vmem>>, %arg6: memref<8x16xf32, #tpu.memory_space<vmem>>) attributes {dimension_semantics = [], scalar_prefetch = 0 : i64, scratch_operands = 0 : i64, tpu.core_type = #tpu.core_type<tc>} {
    %c0 = arith.constant 0 : index
    %c0_0 = arith.constant 0 : index
    %0 = vector.load %arg0[%c0, %c0_0] : memref<8x32xf32, #tpu.memory_space<vmem>>, vector<8x32xf32>
    %c0_1 = arith.constant 0 : index
    %c0_2 = arith.constant 0 : index
    %1 = vector.load %arg2[%c0_1, %c0_2] : memref<32x32xf32, #tpu.memory_space<vmem>>, vector<32x32xf32>
    %cst = arith.constant dense<0.000000e+00> : vector<8x32xf32>
    %2 = tpu.matmul %0, %1, %cst {dimension_numbers = #tpu.dot_dimension_numbers<[1], [0], [0], [1], [0, 0, 1, 1], [], []>} : vector<8x32xf32>, vector<32x32xf32>, vector<8x32xf32> -> vector<8x32xf32>
    %c0_3 = arith.constant 0 : index
    %c0_4 = arith.constant 0 : index
    %3 = vector.load %arg1[%c0_3, %c0_4] : memref<8x32xf32, #tpu.memory_space<vmem>>, vector<8x32xf32>
    %c0_5 = arith.constant 0 : index
    %c0_6 = arith.constant 0 : index
    %4 = vector.load %arg3[%c0_5, %c0_6] : memref<32x32xf32, #tpu.memory_space<vmem>>, vector<32x32xf32>
    %cst_7 = arith.constant dense<0.000000e+00> : vector<8x32xf32>
    %5 = tpu.matmul %3, %4, %cst_7 {dimension_numbers = #tpu.dot_dimension_numbers<[1], [0], [0], [1], [0, 0, 1, 1], [], []>} : vector<8x32xf32>, vector<32x32xf32>, vector<8x32xf32> -> vector<8x32xf32>
    %6 = arith.addf %2, %5 : vector<8x32xf32>
    %c0_8 = arith.constant 0 : index
    %c0_9 = arith.constant 0 : index
    %7 = vector.load %arg4[%c0_8, %c0_9] : memref<1x32xf32, #tpu.memory_space<vmem>>, vector<1x32xf32>
    %8 = vector.broadcast %7 : vector<1x32xf32> to vector<8x32xf32>
    %9 = arith.addf %6, %8 : vector<8x32xf32>
    %10 = vector.extract_strided_slice %9 {offsets = [0, 0], sizes = [8, 16], strides = [1, 1]} : vector<8x32xf32> to vector<8x16xf32>
    %c0_10 = arith.constant 0 : index
    %c0_11 = arith.constant 0 : index
    %11 = vector.load %arg5[%c0_10, %c0_11] : memref<8x16xf32, #tpu.memory_space<vmem>>, vector<8x16xf32>
    tpu.vector_store %arg5[%c0_10, %c0_11], %10 {strides = array<i32>} : memref<8x16xf32, #tpu.memory_space<vmem>>, vector<8x16xf32>,
    %12 = vector.extract_strided_slice %9 {offsets = [0, 16], sizes = [8, 16], strides = [1, 1]} : vector<8x32xf32> to vector<8x16xf32>
    %c0_12 = arith.constant 0 : index
    %c0_13 = arith.constant 0 : index
    %13 = vector.load %arg6[%c0_12, %c0_13] : memref<8x16xf32, #tpu.memory_space<vmem>>, vector<8x16xf32>
    tpu.vector_store %arg6[%c0_12, %c0_13], %12 {strides = array<i32>} : memref<8x16xf32, #tpu.memory_space<vmem>>, vector<8x16xf32>,
    return
  }
}

</mosaic_0001>

<llo_original>
// kernel: tpu_custom_call.1
$region0: #{tpu_custom_call.1}
  #allocation0 [shape = 'u32[]', space=smem, size = 0x4, offset = 0x4, fixed_abs, tag = 'smem constant byte address 0x4 - core index']
  #allocation1 [shape = 'u32[144,128]{1,0:T(1,128)}', space=vmem, size = 0x12000, scoped, tag = 'internal scratch']
  %s0 = inlined_call_operand.hbm [shape: f32[8,32], index: 0, kind: input, shape index: {}]
  %s1 = inlined_call_operand.hbm [shape: f32[8,32], index: 1, kind: input, shape index: {}]
  %s2 = inlined_call_operand.hbm [shape: f32[32,32], index: 2, kind: input, shape index: {}]
  %s3 = inlined_call_operand.hbm [shape: f32[32,32], index: 3, kind: input, shape index: {}]
  %s4 = inlined_call_operand.vmem [shape: f32[1,32], index: 4, kind: input, shape index: {}]
  %s5 = inlined_call_operand.hbm [shape: f32[8,16], index: 5, kind: output, shape index: {0}]
  %s6 = inlined_call_operand.hbm [shape: f32[8,16], index: 6, kind: output, shape index: {1}]
  %7 = xla_tuple %s5, %s6
  %s8 = sld [smem:[#allocation0]]
  $region54: #{tpu_custom_call.1} parent=0
    _
  %s10 = ssub.s32 1, %s8
  %s11 = scalar_select 0, %s10, %s8
  $region1: #{tpu_custom_call.1} parent=0
    #allocation2 [shape = 'u8[4096]{0}', space=vmem, size = 0x1000, scoped, tag = 'input window, operand 0, single buffered']
    #allocation3 [shape = 's32[1]{0}', space=sflag, size = 0x4, scoped, tag = 'scoped memory for tpu_custom_call.1']
    #allocation4 [shape = 's32[1]{0}', space=sflag, size = 0x4, scoped, tag = 'scoped memory for tpu_custom_call.1']
    #allocation5 [shape = 'u8[4096]{0}', space=vmem, size = 0x1000, scoped, tag = 'input window, operand 1, single buffered']
    #allocation6 [shape = 's32[1]{0}', space=sflag, size = 0x4, scoped, tag = 'scoped memory for tpu_custom_call.1']
    #allocation7 [shape = 'u8[16384]{0}', space=vmem, size = 0x4000, scoped, tag = 'input window, operand 2, single buffered']
    #allocation8 [shape = 'u8[16384]{0}', space=vmem, size = 0x4000, scoped, tag = 'input window, operand 3, single buffered']
    #allocation9 [shape = 's32[1]{0}', space=sflag, size = 0x4, scoped, tag = 'scoped memory for tpu_custom_call.1']
    #allocation10 [shape = 'u8[4096]{0}', space=vmem, size = 0x1000, scoped, tag = 'output window, operand 0, single buffered']
    #allocation11 [shape = 'u8[4096]{0}', space=vmem, size = 0x1000, scoped, tag = 'output window, operand 1, single buffered']
    #allocation12 [shape = 's32[1]{0}', space=sflag, size = 0x4, scoped, tag = 'scoped memory for tpu_custom_call.1']
    %12 = vsyncpa [#allocation3], 0
    %13 = vsyncpa [#allocation6], 0
    %14 = vsyncpa [#allocation9], 0
    %15 = vsyncpa [#allocation4], 0
    %16 = vsyncpa [#allocation12], 0
    // Predicated region
    $region2: #{tpu_custom_call.1} parent=1 // pred_check
      _
    $region3: #{tpu_custom_call.1} parent=1 // pred_check_branch
      %18 = sbr.rel (0) target = $region5
    $region4: #{tpu_custom_call.1} parent=1 // pred_region
      %s20 = ssub.s32 128, 128
      %21 = vsyncadd [#allocation3], %s20
      %s23 = sshll.u32 [#allocation2], 4
      %s24 = int_to_ptr.vmem [resolvable:$true] %s23
      %26 = dma.hbm_to_vmem [thread:$0]  %s0, 128, %s24, [#allocation3]
    $region5: #{tpu_custom_call.1} parent=1 // pred_fallthru
      _
    // Predicated region
    $region6: #{tpu_custom_call.1} parent=1 // pred_check
      _
    $region7: #{tpu_custom_call.1} parent=1 // pred_check_branch
      %28 = sbr.rel (0) target = $region9
    $region8: #{tpu_custom_call.1} parent=1 // pred_region
      %s30 = ssub.s32 128, 128
      %31 = vsyncadd [#allocation6], %s30
      %s33 = sshll.u32 [#allocation5], 4
      %s34 = int_to_ptr.vmem [resolvable:$true] %s33
      %36 = dma.hbm_to_vmem [thread:$0]  %s1, 128, %s34, [#allocation6]
    $region9: #{tpu_custom_call.1} parent=1 // pred_fallthru
      _
    // Predicated region
    $region10: #{tpu_custom_call.1} parent=1 // pred_check
      _
    $region11: #{tpu_custom_call.1} parent=1 // pred_check_branch
      %38 = sbr.rel (0) target = $region13
    $region12: #{tpu_custom_call.1} parent=1 // pred_region
      %s40 = ssub.s32 512, 512
      %41 = vsyncadd [#allocation6], %s40
      %s42 = sshll.u32 [#allocation7], 4
      %s43 = int_to_ptr.vmem [resolvable:$true] %s42
      %48 = dma.hbm_to_vmem [thread:$0]  %s2, 512, %s43, [#allocation6], 128, 128, 8
    $region13: #{tpu_custom_call.1} parent=1 // pred_fallthru
      _
    // Predicated region
    $region14: #{tpu_custom_call.1} parent=1 // pred_check
      _
    $region15: #{tpu_custom_call.1} parent=1 // pred_check_branch
      %50 = sbr.rel (0) target = $region17
    $region16: #{tpu_custom_call.1} parent=1 // pred_region
      %s52 = ssub.s32 512, 512
      %53 = vsyncadd [#allocation9], %s52
      %s54 = sshll.u32 [#allocation8], 4
      %s55 = int_to_ptr.vmem [resolvable:$true] %s54
      %60 = dma.hbm_to_vmem [thread:$0]  %s3, 512, %s55, [#allocation9], 128, 128, 8
    $region17: #{tpu_custom_call.1} parent=1 // pred_fallthru
      _
    // Predicated region
    $region18: #{tpu_custom_call.1} parent=1 // pred_check
      _
    $region19: #{tpu_custom_call.1} parent=1 // pred_check_branch
      %62 = sbr.rel (0) target = $region21
    $region20: #{tpu_custom_call.1} parent=1 // pred_region
      _
    $region21: #{tpu_custom_call.1} parent=1 // pred_fallthru
      _
    // Predicated region
    $region22: #{tpu_custom_call.1} parent=1 // pred_check
      _
    $region23: #{tpu_custom_call.1} parent=1 // pred_check_branch
      %64 = sbr.rel (0) target = $region25
    $region24: #{tpu_custom_call.1} parent=1 // pred_region
      %65 = dma.done [#allocation3], 128
    $region25: #{tpu_custom_call.1} parent=1 // pred_fallthru
      _
    // Predicated region
    $region26: #{tpu_custom_call.1} parent=1 // pred_check
      _
    $region27: #{tpu_custom_call.1} parent=1 // pred_check_branch
      %67 = sbr.rel (0) target = $region29
    $region28: #{tpu_custom_call.1} parent=1 // pred_region
      %68 = dma.done [#allocation6], 128
    $region29: #{tpu_custom_call.1} parent=1 // pred_fallthru
      _
    // Predicated region
    $region30: #{tpu_custom_call.1} parent=1 // pred_check
      _
    $region31: #{tpu_custom_call.1} parent=1 // pred_check_branch
      %70 = sbr.rel (0) target = $region33
    $region32: #{tpu_custom_call.1} parent=1 // pred_region
      %71 = dma.done [#allocation6], 512
    $region33: #{tpu_custom_call.1} parent=1 // pred_fallthru
      _
    // Predicated region
    $region34: #{tpu_custom_call.1} parent=1 // pred_check
      _
    $region35: #{tpu_custom_call.1} parent=1 // pred_check_branch
      %73 = sbr.rel (0) target = $region37
    $region36: #{tpu_custom_call.1} parent=1 // pred_region
      %74 = dma.done [#allocation9], 512
    $region37: #{tpu_custom_call.1} parent=1 // pred_fallthru
      _
    %v75 = vld [vmem:[#allocation2] sm:$0xff]
    %v76 = vld [vmem:[#allocation7] sm:$0xff]
    %v77 = vld [vmem:[#allocation7 + $0x8] sm:$0xff]
    %v78 = vld [vmem:[#allocation7 + $0x10] sm:$0xff]
    %v79 = vld [vmem:[#allocation7 + $0x18] sm:$0xff]
    %v80 = vld [vmem:[#allocation5] sm:$0xff]
    %v81 = vld [vmem:[#allocation8] sm:$0xff]
    %v82 = vld [vmem:[#allocation8 + $0x8] sm:$0xff]
    %v83 = vld [vmem:[#allocation8 + $0x10] sm:$0xff]
    %v84 = vld [vmem:[#allocation8 + $0x18] sm:$0xff]
    %vm85 = vcmask 261120
    %v87 = vsel %vm85, %v80, 0
    %89 = vmatprep.subr.mxu0 0.0
    %90 = vmatpush1.msra.mxu0 0.0
    %91 = vmatprep.subr.mxu0 0.0
    %92 = vmatpush1.msra.mxu0 0.0
    %93 = vmatprep.subr.mxu0 0.0
    %94 = vmatpush1.msra.mxu0 0.0
    %95 = vmatprep.subr.mxu0 0.0
    %96 = vmatpush1.msra.mxu0 0.0
    %97 = vmatprep.subr.mxu0 0.0
    %98 = vmatpush1.msra.mxu0 0.0
    %99 = vmatprep.subr.mxu0 0.0
    %100 = vmatpush1.msra.mxu0 0.0
    %101 = vmatprep.subr.mxu0 0.0
    %102 = vmatpush1.msra.mxu0 0.0
    %103 = vmatprep.subr.mxu0 0.0
    %104 = vmatpush1.msra.mxu0 0.0
    %105 = vmatprep.subr.mxu0 0.0
    %106 = vmatpush1.msra.mxu0 0.0
    %107 = vmatprep.subr.mxu0 0.0
    %108 = vmatpush1.msra.mxu0 0.0
    %109 = vmatprep.subr.mxu0 0.0
    %110 = vmatpush1.msra.mxu0 0.0
    %111 = vmatprep.subr.mxu0 0.0
    %112 = vmatpush1.msra.mxu0 0.0
    %113 = vmatprep.subr.mxu0 0.0
    %114 = vmatpush1.msra.mxu0 %v84
    %115 = vmatprep.subr.mxu0 0.0
    %116 = vmatpush1.msra.mxu0 %v83
    %117 = vmatprep.subr.mxu0 0.0
    %118 = vmatpush1.msra.mxu0 %v82
    %119 = vmatprep.subr.mxu0 0.0
    %120 = vmatpush1.msra.mxu0 %v81
    %121 = vmatprep.subr.mxu0 0.0
    %122 = vmatpush2.msra.mxu0 0.0
    %123 = vmatprep.subr.mxu0 0.0
    %124 = vmatpush2.msra.mxu0 0.0
    %125 = vmatprep.subr.mxu0 0.0
    %126 = vmatpush2.msra.mxu0 0.0
    %127 = vmatprep.subr.mxu0 0.0
    %128 = vmatpush2.msra.mxu0 0.0
    %129 = vmatprep.subr.mxu0 0.0
    %130 = vmatpush2.msra.mxu0 0.0
    %131 = vmatprep.subr.mxu0 0.0
    %132 = vmatpush2.msra.mxu0 0.0
    %133 = vmatprep.subr.mxu0 0.0
    %134 = vmatpush2.msra.mxu0 0.0
    %135 = vmatprep.subr.mxu0 0.0
    %136 = vmatpush2.msra.mxu0 0.0
    %137 = vmatprep.subr.mxu0 0.0
    %138 = vmatpush2.msra.mxu0 0.0
    %139 = vmatprep.subr.mxu0 0.0
    %140 = vmatpush2.msra.mxu0 0.0
    %141 = vmatprep.subr.mxu0 0.0
    %142 = vmatpush2.msra.mxu0 0.0
    %143 = vmatprep.subr.mxu0 0.0
    %144 = vmatpush2.msra.mxu0 0.0
    %145 = vmatprep.subr.mxu0 0.0
    %146 = vmatpush2.msra.mxu0 0.0
    %147 = vmatprep.subr.mxu0 0.0
    %148 = vmatpush2.msra.mxu0 0.0
    %149 = vmatprep.subr.mxu0 0.0
    %150 = vmatpush2.msra.mxu0 0.0
    %151 = vmatprep.subr.mxu0 0.0
    %152 = vmatpush2.msra.mxu0 0.0
    %153 = vmatprep.mubr.f32.mxu0 0.0
    %154 = vmatmul.mubr.f32.gmra.mxu0 %v87
    %v155 = vpop.f32.mrf.mxu0
    %v156 = vadd.f32 0.0, %v155
    %v157 = vpop.f32.mrf.mxu0
    %158 = vdwg.mxu0
    %v160 = vsel %vm85, %v75, 0
    %162 = vmatprep.subr.mxu0 0.0
    %163 = vmatpush1.msra.mxu0 0.0
    %164 = vmatprep.subr.mxu0 0.0
    %165 = vmatpush1.msra.mxu0 0.0
    %166 = vmatprep.subr.mxu0 0.0
    %167 = vmatpush1.msra.mxu0 0.0
    %168 = vmatprep.subr.mxu0 0.0
    %169 = vmatpush1.msra.mxu0 0.0
    %170 = vmatprep.subr.mxu0 0.0
    %171 = vmatpush1.msra.mxu0 0.0
    %172 = vmatprep.subr.mxu0 0.0
    %173 = vmatpush1.msra.mxu0 0.0
    %174 = vmatprep.subr.mxu0 0.0
    %175 = vmatpush1.msra.mxu0 0.0
    %176 = vmatprep.subr.mxu0 0.0
    %177 = vmatpush1.msra.mxu0 0.0
    %178 = vmatprep.subr.mxu0 0.0
    %179 = vmatpush1.msra.mxu0 0.0
    %180 = vmatprep.subr.mxu0 0.0
    %181 = vmatpush1.msra.mxu0 0.0
    %182 = vmatprep.subr.mxu0 0.0
    %183 = vmatpush1.msra.mxu0 0.0
    %184 = vmatprep.subr.mxu0 0.0
    %185 = vmatpush1.msra.mxu0 0.0
    %186 = vmatprep.subr.mxu0 0.0
    %187 = vmatpush1.msra.mxu0 %v79
    %188 = vmatprep.subr.mxu0 0.0
    %189 = vmatpush1.msra.mxu0 %v78
    %190 = vmatprep.subr.mxu0 0.0
    %191 = vmatpush1.msra.mxu0 %v77
    %192 = vmatprep.subr.mxu0 0.0
    %193 = vmatpush1.msra.mxu0 %v76
    %194 = vmatprep.subr.mxu0 0.0
    %195 = vmatpush2.msra.mxu0 0.0
    %196 = vmatprep.subr.mxu0 0.0
    %197 = vmatpush2.msra.mxu0 0.0
    %198 = vmatprep.subr.mxu0 0.0
    %199 = vmatpush2.msra.mxu0 0.0
    %200 = vmatprep.subr.mxu0 0.0
    %201 = vmatpush2.msra.mxu0 0.0
    %202 = vmatprep.subr.mxu0 0.0
    %203 = vmatpush2.msra.mxu0 0.0
    %204 = vmatprep.subr.mxu0 0.0
    %205 = vmatpush2.msra.mxu0 0.0
    %206 = vmatprep.subr.mxu0 0.0
    %207 = vmatpush2.msra.mxu0 0.0
    %208 = vmatprep.subr.mxu0 0.0
    %209 = vmatpush2.msra.mxu0 0.0
    %210 = vmatprep.subr.mxu0 0.0
    %211 = vmatpush2.msra.mxu0 0.0
    %212 = vmatprep.subr.mxu0 0.0
    %213 = vmatpush2.msra.mxu0 0.0
    %214 = vmatprep.subr.mxu0 0.0
    %215 = vmatpush2.msra.mxu0 0.0
    %216 = vmatprep.subr.mxu0 0.0
    %217 = vmatpush2.msra.mxu0 0.0
    %218 = vmatprep.subr.mxu0 0.0
    %219 = vmatpush2.msra.mxu0 0.0
    %220 = vmatprep.subr.mxu0 0.0
    %221 = vmatpush2.msra.mxu0 0.0
    %222 = vmatprep.subr.mxu0 0.0
    %223 = vmatpush2.msra.mxu0 0.0
    %224 = vmatprep.subr.mxu0 0.0
    %225 = vmatpush2.msra.mxu0 0.0
    %226 = vmatprep.mubr.f32.mxu0 0.0
    %227 = vmatmul.mubr.f32.gmra.mxu0 %v160
    %v228 = vpop.f32.mrf.mxu0
    %v229 = vadd.f32 %v156, %v228
    %v230 = vpop.f32.mrf.mxu0
    %231 = vdwg.mxu0
    %v232 = vld [vmem:[%s4] sm:$0x1]
    %v234 = vlaneseq
    %v235 = vshrl.u32 %v234, 7
    %v236 = vsub.s32 0, %v235
    %v237 = vrot.slane %v232, %v236
    %v239 = vadd.f32 %v229, %v237
    %vm240 = vcmask 130048
    %241 = vst.msk [vmem:[#allocation10] sm:$0xff] %vm240, %v239
    %243 = vrot.lane.b32.xlu0 %v239, 112
    %v244 = vpop.permute.xlu0 %243
    %246 = vst.msk [vmem:[#allocation11] sm:$0xff] %vm240, %v244
    // Predicated region
    $region38: #{tpu_custom_call.1} parent=1 // pred_check
      _
    $region39: #{tpu_custom_call.1} parent=1 // pred_check_branch
      %248 = sbr.rel (0) target = $region41
    $region40: #{tpu_custom_call.1} parent=1 // pred_region
      %s250 = ssub.s32 128, 128
      %251 = vsyncadd [#allocation4], %s250
      %s253 = sshll.u32 [#allocation10], 4
      %s254 = int_to_ptr.vmem [resolvable:$true] %s253
      %256 = dma.vmem_to_hbm [thread:$0]  %s254, 128, %s5, [#allocation4]
    $region41: #{tpu_custom_call.1} parent=1 // pred_fallthru
      _
    // Predicated region
    $region42: #{tpu_custom_call.1} parent=1 // pred_check
      _
    $region43: #{tpu_custom_call.1} parent=1 // pred_check_branch
      %258 = sbr.rel (0) target = $region45
    $region44: #{tpu_custom_call.1} parent=1 // pred_region
      %s260 = ssub.s32 128, 128
      %261 = vsyncadd [#allocation12], %s260
      %s263 = sshll.u32 [#allocation11], 4
      %s264 = int_to_ptr.vmem [resolvable:$true] %s263
      %266 = dma.vmem_to_hbm [thread:$0]  %s264, 128, %s6, [#allocation12]
    $region45: #{tpu_custom_call.1} parent=1 // pred_fallthru
      _
    // Predicated region
    $region46: #{tpu_custom_call.1} parent=1 // pred_check
      _
    $region47: #{tpu_custom_call.1} parent=1 // pred_check_branch
      %268 = sbr.rel (0) target = $region49
    $region48: #{tpu_custom_call.1} parent=1 // pred_region
      %269 = dma.done [#allocation4], 128
    $region49: #{tpu_custom_call.1} parent=1 // pred_fallthru
      _
    // Predicated region
    $region50: #{tpu_custom_call.1} parent=1 // pred_check
      _
    $region51: #{tpu_custom_call.1} parent=1 // pred_check_branch
      %271 = sbr.rel (0) target = $region53
    $region52: #{tpu_custom_call.1} parent=1 // pred_region
      %272 = dma.done [#allocation12], 128
    $region53: #{tpu_custom_call.1} parent=1 // pred_fallthru
      _
    %273 = vsyncpa [#allocation3], 1
    %274 = vsyncpa [#allocation6], 1
    %275 = vsyncpa [#allocation9], 1
    %276 = vsyncpa [#allocation4], 1
    %277 = vsyncpa [#allocation12], 1

</llo_original>
